<compile_context>
chip_gen: v7x
topology: tpu7x:2x2x1
jax: 0.10.0
libtpu: 0.0.40
codegen_flags: <defaults>
</compile_context>

<pallas_src>
import functools

import jax
import jax.numpy as jnp
from jax.experimental import pallas as pl
from jax.experimental.pallas import tpu as pltpu


def _round_up(x, m):
    return ((x + m - 1) // m) * m


# ----------------------------------------------------------------------------
# Parameter preparation (done once, NOT per call)
# ----------------------------------------------------------------------------
def prepare_initializer_params(w, b, *, weight_dtype=None):
    """Pad (and optionally cast) the projection weight/bias once at init time.

    w: [D, 2H], b: [2H] or [1, 2H].  Returns (w_padded [Kp, Np],
    b_padded [1, Np] f32, D, 2H) with Kp, Np rounded up to 128 so the runtime
    path never touches the weight again.
    """
    D, N = w.shape
    b = jnp.reshape(b, (1, N)).astype(jnp.float32)
    if weight_dtype is not None:
        w = w.astype(weight_dtype)          # e.g. bf16 weights: halves W HBM bytes
    Kp = _round_up(D, 128)
    Np = _round_up(N, 128)
    if (Kp, Np) != (D, N):
        w = jnp.pad(w, ((0, Kp - D), (0, Np - N)))
        b = jnp.pad(b, ((0, 0), (0, Np - N)))
    return w, b, D, N


# ----------------------------------------------------------------------------
# Kernels
# ----------------------------------------------------------------------------
def _single_pass_kernel(x_ref, w_ref, b_ref, out_ref):
    # Full-K block: one MXU pass, bias added in the same step, f32 store.
    out_ref[...] = (
        jnp.dot(x_ref[...], w_ref[...], preferred_element_type=jnp.float32)
        + b_ref[...].astype(jnp.float32)
    )


def _ktiled_kernel(x_ref, w_ref, b_ref, out_ref):
    # K-tiled: accumulate directly in the resident f32 output block; the bias
    # is folded into the k==0 init so there is no epilogue.
    @pl.when(pl.program_id(2) == 0)
    def _():
        out_ref[...] = jnp.broadcast_to(
            b_ref[...].astype(jnp.float32), out_ref.shape
        )

    out_ref[...] += jnp.dot(
        x_ref[...], w_ref[...], preferred_element_type=jnp.float32
    )


# ----------------------------------------------------------------------------
# Tile selection
# ----------------------------------------------------------------------------
def _tile_candidates(dim):
    cands = [dim]
    for c in (4096, 2048, 1024, 512, 256, 128):
        if c < dim and dim % c == 0:
            cands.append(c)
    return cands


def _choose_nk_tiles(tm, Kp, Np, in_itemsize, budget_bytes):
    tk_cands = _tile_candidates(Kp)
    tn_cands = _tile_candidates(Np)

    def vmem_need(tk, tn):
        # 2x pipeline buffers for x/w/b input blocks + 2x for the f32 out block.
        return (2 * in_itemsize * (tm * tk + tk * tn + tn)
                + 2 * 4 * (tm * tn))

    for tk in tk_cands:            # prefer full K (single-pass, no k axis)
        for tn in tn_cands:        # then the widest lane-dense output slab
            need = vmem_need(tk, tn)
            if need <= budget_bytes:
                return tn, tk, need
    tk, tn = tk_cands[-1], tn_cands[-1]
    return tn, tk, vmem_need(tk, tn)


# ----------------------------------------------------------------------------
# Pallas matmul + bias on pre-padded params
# ----------------------------------------------------------------------------
def _pallas_matmul_bias(x, w_padded, b_padded, vmem_budget_bytes):
    """x:[B,D] (unpadded), w_padded:[Kp,Np], b_padded:[1,Np].  Returns f32 [Bp,Np]."""
    B, D = x.shape
    Kp, Np = w_padded.shape
    in_itemsize = jnp.dtype(w_padded.dtype).itemsize

    # Batch tiling: collapse the batch grid axis to 1 for modest batches so
    # the weight streams from HBM exactly once.
    Bp8 = _round_up(max(B, 1), 8)
    tm = min(Bp8, 256)
    Bp = _round_up(B, tm)

    # Only x is padded at call time (rows -> Bp, cols -> Kp; zero K-padding
    # contributes 0 to the dot).
    xp = x
    if (Bp, Kp) != (B, D):
        xp = jnp.pad(x, ((0, Bp - B), (0, Kp - D)))
    if xp.dtype != w_padded.dtype:
        xp = xp.astype(w_padded.dtype)

    tn, tk, vmem_need = _choose_nk_tiles(tm, Kp, Np, in_itemsize, vmem_budget_bytes)
    grid_i = Bp // tm
    vmem_limit = int(min(31 << 20, max(vmem_need + (8 << 20), 16 << 20)))

    cost = pl.CostEstimate(
        flops=2 * Bp * Kp * Np,
        transcendentals=0,
        bytes_accessed=(in_itemsize * (Bp * Kp + grid_i * Kp * Np)
                        + 4 * (Bp * Np + Np)),
    )

    if tk == Kp:
        # Single pass over K: no scratch, no reduction axis.
        out = pl.pallas_call(
            _single_pass_kernel,
            out_shape=jax.ShapeDtypeStruct((Bp, Np), jnp.float32),
            grid=(grid_i, Np // tn),
            in_specs=[
                pl.BlockSpec((tm, Kp), lambda i, j: (i, 0)),
                pl.BlockSpec((Kp, tn), lambda i, j: (0, j)),
                pl.BlockSpec((1, tn), lambda i, j: (0, j)),
            ],
            out_specs=pl.BlockSpec((tm, tn), lambda i, j: (i, j)),
            compiler_params=pltpu.CompilerParams(
                dimension_semantics=("parallel", "parallel"),
                vmem_limit_bytes=vmem_limit,
            ),
            cost_estimate=cost,
        )(xp, w_padded, b_padded)
    else:
        # K-tiled: reduction axis last, accumulate in the resident f32 output.
        out = pl.pallas_call(
            _ktiled_kernel,
            out_shape=jax.ShapeDtypeStruct((Bp, Np), jnp.float32),
            grid=(grid_i, Np // tn, Kp // tk),
            in_specs=[
                pl.BlockSpec((tm, tk), lambda i, j, k: (i, k)),
                pl.BlockSpec((tk, tn), lambda i, j, k: (k, j)),
                pl.BlockSpec((1, tn), lambda i, j, k: (0, j)),
            ],
            out_specs=pl.BlockSpec((tm, tn), lambda i, j, k: (i, j)),
            compiler_params=pltpu.CompilerParams(
                dimension_semantics=("parallel", "parallel", "arbitrary"),
                vmem_limit_bytes=vmem_limit,
            ),
            cost_estimate=cost,
        )(xp, w_padded, b_padded)

    return out


# ----------------------------------------------------------------------------
# Public wrapper: x [B, D] -> (h0, c0), each [B, H]
# ----------------------------------------------------------------------------
def lstm_cell_initializer(x, w_padded, b_padded, input_dim, out_dim, hidden_size,
                          *, force_pallas=False, vmem_budget_bytes=20 << 20):
    B, D = x.shape
    assert D == input_dim
    assert out_dim == 2 * hidden_size
    Kp, Np = w_padded.shape
    assert b_padded.shape == (1, Np)

    # Dispatch: Pallas only when the weight stream / batch is big enough to
    # pay for the launch; tiny problems stay on fused XLA.
    weight_bytes = input_dim * out_dim * jnp.dtype(w_padded.dtype).itemsize
    use_pallas = force_pallas or (B >= 64 and weight_bytes >= (1 << 20))

    if use_pallas:
        out = _pallas_matmul_bias(x, w_padded, b_padded, vmem_budget_bytes)
    else:
        xk = x if D == Kp else jnp.pad(x, ((0, 0), (0, Kp - D)))
        if xk.dtype != w_padded.dtype:
            xk = xk.astype(w_padded.dtype)
        out = jnp.dot(xk, w_padded, preferred_element_type=jnp.float32) + b_padded

    out = out[:B, :out_dim].astype(x.dtype)
    h0 = out[:, :hidden_size]
    c0 = out[:, hidden_size:]
    return h0, c0


if __name__ == "__main__":
    key = jax.random.PRNGKey(0)
    kx, kw, kb = jax.random.split(key, 3)

    # --- Small shapes consistent with an LSTM state initializer -------------
    batch, input_dim, hidden_size = 2, 16, 32
    x = jax.random.normal(kx, (batch, input_dim), dtype=jnp.float32)
    w = jax.random.normal(kw, (input_dim, 2 * hidden_size), dtype=jnp.float32) * 0.02
    b = jax.random.normal(kb, (1, 2 * hidden_size), dtype=jnp.float32) * 0.01

    wp, bp, D, N = prepare_initializer_params(w, b)

    # Exercise the single-pass Pallas kernel (force past the tiny-shape XLA dispatch).
    h0, c0 = lstm_cell_initializer(x, wp, bp, D, N, hidden_size, force_pallas=True)
    jax.block_until_ready((h0, c0))
    ref = x @ w + b
    assert h0.shape == (batch, hidden_size) and c0.shape == (batch, hidden_size)
    assert jnp.allclose(h0, ref[:, :hidden_size], atol=1e-5)
    assert jnp.allclose(c0, ref[:, hidden_size:], atol=1e-5)

    # Default dispatch path for tiny shapes (plain XLA) must agree too.
    h0x, c0x = lstm_cell_initializer(x, wp, bp, D, N, hidden_size)
    jax.block_until_ready((h0x, c0x))
    assert jnp.allclose(h0x, h0, atol=1e-5) and jnp.allclose(c0x, c0, atol=1e-5)

    # --- Modest second check exercising the K-tiled (reduction-axis) kernel --
    # A tight VMEM budget forces tk < Kp so the accumulate-in-output path runs.
    B2, D2, H2 = 8, 1024, 256
    k2x, k2w, k2b = jax.random.split(jax.random.PRNGKey(1), 3)
    x2 = jax.random.normal(k2x, (B2, D2), dtype=jnp.float32)
    w2 = jax.random.normal(k2w, (D2, 2 * H2), dtype=jnp.float32) * 0.02
    b2 = jax.random.normal(k2b, (1, 2 * H2), dtype=jnp.float32) * 0.01
    wp2, bp2, D2_, N2 = prepare_initializer_params(w2, b2)
    h2, c2 = lstm_cell_initializer(
        x2, wp2, bp2, D2_, N2, H2, force_pallas=True, vmem_budget_bytes=256 * 1024
    )
    jax.block_until_ready((h2, c2))
    ref2 = x2 @ w2 + b2
    assert jnp.allclose(h2, ref2[:, :H2], atol=1e-4, rtol=1e-4)
    assert jnp.allclose(c2, ref2[:, H2:], atol=1e-4, rtol=1e-4)

    print("KERNEL_OK")
</pallas_src>

<mosaic_0001>
module attributes {stable_mosaic.version = 11 : i64} {
  func.func @_single_pass_kernel(%arg0: i32, %arg1: i32, %arg2: memref<8x128xf32, #tpu.memory_space<vmem>>, %arg3: memref<128x128xf32, #tpu.memory_space<vmem>>, %arg4: memref<1x128xf32, #tpu.memory_space<vmem>>, %arg5: memref<8x128xf32, #tpu.memory_space<vmem>>) attributes {dimension_semantics = [#tpu.dimension_semantics<parallel>, #tpu.dimension_semantics<parallel>], iteration_bounds = array<i64: 1, 1>, scalar_prefetch = 0 : i64, scratch_operands = 0 : i64, tpu.core_type = #tpu.core_type<tc>, window_params = [{transform_indices = @transform_0, window_bounds = array<i64: 8, 128>}, {transform_indices = @transform_1, window_bounds = array<i64: 128, 128>}, {transform_indices = @transform_2, window_bounds = array<i64: 1, 128>}, {transform_indices = @transform_3, window_bounds = array<i64: 8, 128>}]} {
    %c0 = arith.constant 0 : index
    %c0_0 = arith.constant 0 : index
    %0 = vector.load %arg2[%c0, %c0_0] : memref<8x128xf32, #tpu.memory_space<vmem>>, vector<8x128xf32>
    %c0_1 = arith.constant 0 : index
    %c0_2 = arith.constant 0 : index
    %1 = vector.load %arg3[%c0_1, %c0_2] : memref<128x128xf32, #tpu.memory_space<vmem>>, vector<128x128xf32>
    %cst = arith.constant dense<0.000000e+00> : vector<8x128xf32>
    %2 = tpu.matmul %0, %1, %cst {dimension_numbers = #tpu.dot_dimension_numbers<[1], [0], [0], [1], [0, 0, 1, 1], [], []>} : vector<8x128xf32>, vector<128x128xf32>, vector<8x128xf32> -> vector<8x128xf32>
    %c0_3 = arith.constant 0 : index
    %c0_4 = arith.constant 0 : index
    %3 = vector.load %arg4[%c0_3, %c0_4] : memref<1x128xf32, #tpu.memory_space<vmem>>, vector<1x128xf32>
    %4 = vector.broadcast %3 : vector<1x128xf32> to vector<8x128xf32>
    %5 = arith.addf %2, %4 : vector<8x128xf32>
    %c0_5 = arith.constant 0 : index
    %c0_6 = arith.constant 0 : index
    %6 = vector.load %arg5[%c0_5, %c0_6] : memref<8x128xf32, #tpu.memory_space<vmem>>, vector<8x128xf32>
    tpu.vector_store %arg5[%c0_5, %c0_6], %5 {strides = array<i32>} : memref<8x128xf32, #tpu.memory_space<vmem>>, vector<8x128xf32>,
    return
  }
  func.func @transform_0(%arg0: i32, %arg1: i32) -> (i32, i32) {
    %c0_i32 = arith.constant 0 : i32
    %c0_i32_0 = arith.constant 0 : i32
    return %arg0, %c0_i32 : i32, i32
  }
  func.func @transform_1(%arg0: i32, %arg1: i32) -> (i32, i32) {
    %c0_i32 = arith.constant 0 : i32
    %c0_i32_0 = arith.constant 0 : i32
    return %c0_i32, %arg1 : i32, i32
  }
  func.func @transform_2(%arg0: i32, %arg1: i32) -> (i32, i32) {
    %c0_i32 = arith.constant 0 : i32
    %c0_i32_0 = arith.constant 0 : i32
    return %c0_i32, %arg1 : i32, i32
  }
  func.func @transform_3(%arg0: i32, %arg1: i32) -> (i32, i32) {
    %c0_i32 = arith.constant 0 : i32
    return %arg0, %arg1 : i32, i32
  }
}

</mosaic_0001>

<llo_original>
// kernel: tpu_custom_call.1
$region0: #{tpu_custom_call.1}
  #allocation0 [shape = 'u32[]', space=smem, size = 0x4, offset = 0x4, fixed_abs, tag = 'smem constant byte address 0x4 - core index']
  #allocation1 [shape = 'u32[144,128]{1,0:T(1,128)}', space=vmem, size = 0x12000, scoped, tag = 'internal scratch']
  %s0 = inlined_call_operand.hbm [shape: f32[8,128], index: 0, kind: input, shape index: {}]
  %s1 = inlined_call_operand.hbm [shape: f32[128,128], index: 1, kind: input, shape index: {}]
  %s2 = inlined_call_operand.vmem [shape: f32[1,128], index: 2, kind: input, shape index: {}]
  %s3 = inlined_call_operand.hbm [shape: f32[8,128], index: 3, kind: output, shape index: {}]
  %s4 = sld [smem:[#allocation0]]
  $region30: #{tpu_custom_call.1} parent=0
    _
  %s6 = ssub.s32 1, %s4
  %s7 = scalar_select 0, %s6, %s4
  $region1: #{tpu_custom_call.1} parent=0
    #allocation2 [shape = 'u8[4096]{0}', space=vmem, size = 0x1000, scoped, tag = 'input window, operand 0, single buffered']
    #allocation3 [shape = 's32[1]{0}', space=sflag, size = 0x4, scoped, tag = 'scoped memory for tpu_custom_call.1']
    #allocation4 [shape = 's32[1]{0}', space=sflag, size = 0x4, scoped, tag = 'scoped memory for tpu_custom_call.1']
    #allocation5 [shape = 'u8[65536]{0}', space=vmem, size = 0x10000, scoped, tag = 'input window, operand 1, single buffered']
    #allocation6 [shape = 's32[1]{0}', space=sflag, size = 0x4, scoped, tag = 'scoped memory for tpu_custom_call.1']
    #allocation7 [shape = 'u8[4096]{0}', space=vmem, size = 0x1000, scoped, tag = 'output window, operand 0, single buffered']
    %8 = vsyncpa [#allocation3], 0
    %9 = vsyncpa [#allocation6], 0
    %10 = vsyncpa [#allocation4], 0
    // Predicated region
    $region2: #{tpu_custom_call.1} parent=1 // pred_check
      _
    $region3: #{tpu_custom_call.1} parent=1 // pred_check_branch
      %12 = sbr.rel (0) target = $region5
    $region4: #{tpu_custom_call.1} parent=1 // pred_region
      %s14 = ssub.s32 128, 128
      %15 = vsyncadd [#allocation3], %s14
      %s17 = sshll.u32 [#allocation2], 4
      %s18 = int_to_ptr.vmem [resolvable:$true] %s17
      %20 = dma.hbm_to_vmem [thread:$0]  %s0, 128, %s18, [#allocation3]
    $region5: #{tpu_custom_call.1} parent=1 // pred_fallthru
      _
    // Predicated region
    $region6: #{tpu_custom_call.1} parent=1 // pred_check
      _
    $region7: #{tpu_custom_call.1} parent=1 // pred_check_branch
      %22 = sbr.rel (0) target = $region9
    $region8: #{tpu_custom_call.1} parent=1 // pred_region
      %s24 = ssub.s32 2048, 2048
      %25 = vsyncadd [#allocation6], %s24
      %s26 = sshll.u32 [#allocation5], 4
      %s27 = int_to_ptr.vmem [resolvable:$true] %s26
      %32 = dma.hbm_to_vmem [thread:$0]  %s1, 2048, %s27, [#allocation6], 128, 128, 8
    $region9: #{tpu_custom_call.1} parent=1 // pred_fallthru
      _
    // Predicated region
    $region10: #{tpu_custom_call.1} parent=1 // pred_check
      _
    $region11: #{tpu_custom_call.1} parent=1 // pred_check_branch
      %34 = sbr.rel (0) target = $region13
    $region12: #{tpu_custom_call.1} parent=1 // pred_region
      _
    $region13: #{tpu_custom_call.1} parent=1 // pred_fallthru
      _
    // Predicated region
    $region14: #{tpu_custom_call.1} parent=1 // pred_check
      _
    $region15: #{tpu_custom_call.1} parent=1 // pred_check_branch
      %36 = sbr.rel (0) target = $region17
    $region16: #{tpu_custom_call.1} parent=1 // pred_region
      %37 = dma.done [#allocation3], 128
    $region17: #{tpu_custom_call.1} parent=1 // pred_fallthru
      _
    // Predicated region
    $region18: #{tpu_custom_call.1} parent=1 // pred_check
      _
    $region19: #{tpu_custom_call.1} parent=1 // pred_check_branch
      %39 = sbr.rel (0) target = $region21
    $region20: #{tpu_custom_call.1} parent=1 // pred_region
      %40 = dma.done [#allocation6], 2048
    $region21: #{tpu_custom_call.1} parent=1 // pred_fallthru
      _
    %v41 = vld [vmem:[#allocation2] sm:$0xff]
    %v42 = vld [vmem:[#allocation5] sm:$0xff]
    %v43 = vld [vmem:[#allocation5 + $0x8] sm:$0xff]
    %v44 = vld [vmem:[#allocation5 + $0x10] sm:$0xff]
    %v45 = vld [vmem:[#allocation5 + $0x18] sm:$0xff]
    %v46 = vld [vmem:[#allocation5 + $0x20] sm:$0xff]
    %v47 = vld [vmem:[#allocation5 + $0x28] sm:$0xff]
    %v48 = vld [vmem:[#allocation5 + $0x30] sm:$0xff]
    %v49 = vld [vmem:[#allocation5 + $0x38] sm:$0xff]
    %v50 = vld [vmem:[#allocation5 + $0x40] sm:$0xff]
    %v51 = vld [vmem:[#allocation5 + $0x48] sm:$0xff]
    %v52 = vld [vmem:[#allocation5 + $0x50] sm:$0xff]
    %v53 = vld [vmem:[#allocation5 + $0x58] sm:$0xff]
    %v54 = vld [vmem:[#allocation5 + $0x60] sm:$0xff]
    %v55 = vld [vmem:[#allocation5 + $0x68] sm:$0xff]
    %v56 = vld [vmem:[#allocation5 + $0x70] sm:$0xff]
    %v57 = vld [vmem:[#allocation5 + $0x78] sm:$0xff]
    %v58 = vld [vmem:[%s2] sm:$0x1]
    %v60 = vlaneseq
    %v61 = vshrl.u32 %v60, 7
    %v62 = vsub.s32 0, %v61
    %v63 = vrot.slane %v58, %v62
    %65 = vmatprep.subr.mxu0 0.0
    %66 = vmatpush1.msra.mxu0 %v42
    %67 = vmatprep.subr.mxu0 0.0
    %68 = vmatpush1.msra.mxu0 %v43
    %69 = vmatprep.subr.mxu0 0.0
    %70 = vmatpush1.msra.mxu0 %v44
    %71 = vmatprep.subr.mxu0 0.0
    %72 = vmatpush1.msra.mxu0 %v45
    %73 = vmatprep.subr.mxu0 0.0
    %74 = vmatpush1.msra.mxu0 %v46
    %75 = vmatprep.subr.mxu0 0.0
    %76 = vmatpush1.msra.mxu0 %v47
    %77 = vmatprep.subr.mxu0 0.0
    %78 = vmatpush1.msra.mxu0 %v48
    %79 = vmatprep.subr.mxu0 0.0
    %80 = vmatpush1.msra.mxu0 %v49
    %81 = vmatprep.subr.mxu0 0.0
    %82 = vmatpush1.msra.mxu0 %v50
    %83 = vmatprep.subr.mxu0 0.0
    %84 = vmatpush1.msra.mxu0 %v51
    %85 = vmatprep.subr.mxu0 0.0
    %86 = vmatpush1.msra.mxu0 %v52
    %87 = vmatprep.subr.mxu0 0.0
    %88 = vmatpush1.msra.mxu0 %v53
    %89 = vmatprep.subr.mxu0 0.0
    %90 = vmatpush1.msra.mxu0 %v54
    %91 = vmatprep.subr.mxu0 0.0
    %92 = vmatpush1.msra.mxu0 %v55
    %93 = vmatprep.subr.mxu0 0.0
    %94 = vmatpush1.msra.mxu0 %v56
    %95 = vmatprep.subr.mxu0 0.0
    %96 = vmatpush1.msra.mxu0 %v57
    %97 = vmatprep.subr.mxu0 0.0
    %98 = vmatpush1.msra.mxu0 0.0
    %99 = vmatprep.subr.mxu0 0.0
    %100 = vmatpush1.msra.mxu0 0.0
    %101 = vmatprep.subr.mxu0 0.0
    %102 = vmatpush1.msra.mxu0 0.0
    %103 = vmatprep.subr.mxu0 0.0
    %104 = vmatpush1.msra.mxu0 0.0
    %105 = vmatprep.subr.mxu0 0.0
    %106 = vmatpush1.msra.mxu0 0.0
    %107 = vmatprep.subr.mxu0 0.0
    %108 = vmatpush1.msra.mxu0 0.0
    %109 = vmatprep.subr.mxu0 0.0
    %110 = vmatpush1.msra.mxu0 0.0
    %111 = vmatprep.subr.mxu0 0.0
    %112 = vmatpush1.msra.mxu0 0.0
    %113 = vmatprep.subr.mxu0 0.0
    %114 = vmatpush1.msra.mxu0 0.0
    %115 = vmatprep.subr.mxu0 0.0
    %116 = vmatpush1.msra.mxu0 0.0
    %117 = vmatprep.subr.mxu0 0.0
    %118 = vmatpush1.msra.mxu0 0.0
    %119 = vmatprep.subr.mxu0 0.0
    %120 = vmatpush1.msra.mxu0 0.0
    %121 = vmatprep.subr.mxu0 0.0
    %122 = vmatpush1.msra.mxu0 0.0
    %123 = vmatprep.subr.mxu0 0.0
    %124 = vmatpush1.msra.mxu0 0.0
    %125 = vmatprep.subr.mxu0 0.0
    %126 = vmatpush1.msra.mxu0 0.0
    %127 = vmatprep.subr.mxu0 0.0
    %128 = vmatpush1.msra.mxu0 0.0
    %129 = vmatprep.mubr.f32.mxu0 0.0
    %130 = vmatmul.mubr.f32.gmra.mrb[0].mxu0 %v41
    %v131 = vpop.f32.mrb[0].mxu0
    %v132 = vadd.f32 %v63, %v131
    %v133 = vpop.f32.mrb[0].mxu0
    %134 = vdwg.mxu0
    %135 = vst [vmem:[#allocation7] sm:$0xff] %v132
    // Predicated region
    $region22: #{tpu_custom_call.1} parent=1 // pred_check
      _
    $region23: #{tpu_custom_call.1} parent=1 // pred_check_branch
      %137 = sbr.rel (0) target = $region25
    $region24: #{tpu_custom_call.1} parent=1 // pred_region
      %s139 = ssub.s32 128, 128
      %140 = vsyncadd [#allocation4], %s139
      %s142 = sshll.u32 [#allocation7], 4
      %s143 = int_to_ptr.vmem [resolvable:$true] %s142
      %145 = dma.vmem_to_hbm [thread:$0]  %s143, 128, %s3, [#allocation4]
    $region25: #{tpu_custom_call.1} parent=1 // pred_fallthru
      _
    // Predicated region
    $region26: #{tpu_custom_call.1} parent=1 // pred_check
      _
    $region27: #{tpu_custom_call.1} parent=1 // pred_check_branch
      %147 = sbr.rel (0) target = $region29
    $region28: #{tpu_custom_call.1} parent=1 // pred_region
      %148 = dma.done [#allocation4], 128
    $region29: #{tpu_custom_call.1} parent=1 // pred_fallthru
      _
    %149 = vsyncpa [#allocation3], 1
    %150 = vsyncpa [#allocation6], 1
    %151 = vsyncpa [#allocation4], 1

</llo_original>
